<compile_context>
chip_gen: v5e
topology: v5e:2x2
jax: 0.10.0
libtpu: 0.0.40
codegen_flags: <defaults>
</compile_context>

<pallas_src>
import jax
import jax.numpy as jnp
from jax.experimental import pallas as pl
from jax.experimental.pallas import tpu as pltpu


# ----------------------------------------------------------------------------
# LSTM kernel (single layer, batch_first semantics, PyTorch gate order i,f,g,o)
# x input is pre-computed gate pre-activations (x @ W_ih^T + b_ih + b_hh).
# ----------------------------------------------------------------------------
def lstm_kernel(xg_ref, whh_ref, h0_ref, c0_ref,
                y_ref, h1_ref, c1_ref, h_sc, c_sc):
    tb = pl.program_id(1)           # time-block axis (innermost, "arbitrary")

    @pl.when(tb == 0)
    def _():
        h_sc[...] = h0_ref[...]
        c_sc[...] = c0_ref[...]

    T = xg_ref.shape[0]             # timesteps in this block (static)
    H = h_sc.shape[-1]
    whh = whh_ref[...]              # (H, 4H) bf16, loaded once per grid step
    h = h_sc[...]                   # f32 carries
    c = c_sc[...]

    # statically unrolled loop over the T timesteps of this block
    for i in range(T):
        pre = xg_ref[i]             # (B_BLK, 4H) f32: x_t @ W_ih + b_ih + b_hh
        gates = pre + jnp.dot(h.astype(jnp.bfloat16), whh,
                              preferred_element_type=jnp.float32)
        i_g = jax.nn.sigmoid(gates[:, 0:H])
        f_g = jax.nn.sigmoid(gates[:, H:2 * H])
        g_g = jnp.tanh(gates[:, 2 * H:3 * H])
        o_g = jax.nn.sigmoid(gates[:, 3 * H:4 * H])
        c = f_g * c + i_g * g_g
        h = o_g * jnp.tanh(c)
        y_ref[:, i, :] = h          # VMEM store; block written back once

    h_sc[...] = h
    c_sc[...] = c

    @pl.when(tb == pl.num_programs(1) - 1)
    def _():
        h1_ref[...] = h
        c1_ref[...] = c


def run_lstm(xg, w_hh_bf, h0, c0, *, t_blk, b_blk=None):
    # xg: (L, B, 4H) time-major pre-gates; h0/c0: (B, H)
    L, B, G4 = xg.shape
    H = h0.shape[-1]
    if b_blk is None:
        b_blk = B
    assert L % t_blk == 0 and B % b_blk == 0
    nb, nt = B // b_blk, L // t_blk

    y, h1, c1 = pl.pallas_call(
        lstm_kernel,
        out_shape=(jax.ShapeDtypeStruct((B, L, H), jnp.float32),
                   jax.ShapeDtypeStruct((B, H), jnp.float32),
                   jax.ShapeDtypeStruct((B, H), jnp.float32)),
        grid_spec=pltpu.PrefetchScalarGridSpec(
            num_scalar_prefetch=0,
            grid=(nb, nt),
            in_specs=[
                pl.BlockSpec((t_blk, b_blk, G4), lambda b, t: (t, b, 0)),
                pl.BlockSpec((H, G4), lambda b, t: (0, 0)),
                pl.BlockSpec((b_blk, H), lambda b, t: (b, 0)),
                pl.BlockSpec((b_blk, H), lambda b, t: (b, 0)),
            ],
            out_specs=[
                pl.BlockSpec((b_blk, t_blk, H), lambda b, t: (b, t, 0)),
                pl.BlockSpec((b_blk, H), lambda b, t: (b, 0)),
                pl.BlockSpec((b_blk, H), lambda b, t: (b, 0)),
            ],
            scratch_shapes=[pltpu.VMEM((b_blk, H), jnp.float32),
                            pltpu.VMEM((b_blk, H), jnp.float32)],
        ),
        compiler_params=pltpu.CompilerParams(
            dimension_semantics=("parallel", "arbitrary")),
    )(xg, w_hh_bf, h0, c0)

    return y, h1, c1                # y already in (B, L, H)


# ----------------------------------------------------------------------------
# SoftDotAttention + projection kernel — one batch block per grid step.
# Weight matmuls run on the flattened (B_BLK*L, H) slab; logits / weighted
# context use batched dot_general against the per-batch (S, H) context.
# ----------------------------------------------------------------------------
def attn_proj_kernel(x_ref, ctx_ref, mask_ref, win_ref, wout_ref,
                     wproj_ref, bproj_ref, out_ref):
    Bb, L, H = x_ref.shape

    xb = x_ref[...]                                  # (Bb, L, H) f32
    ctx_bf = ctx_ref[...].astype(jnp.bfloat16)       # (Bb, S, H)
    x2 = xb.reshape(Bb * L, H)
    x2_bf = x2.astype(jnp.bfloat16)

    # target = linear_in(h) on the flattened slab (M = Bb*L)
    target = jnp.dot(x2_bf, win_ref[...],
                     preferred_element_type=jnp.float32)            # (Bb*L, H)
    tgt_b = target.reshape(Bb, L, H).astype(jnp.bfloat16)

    # attn = bmm(ctx, target) — contract H against H, batch over Bb
    logits = jax.lax.dot_general(
        tgt_b, ctx_bf,
        dimension_numbers=(((2,), (2,)), ((0,), (0,))),
        preferred_element_type=jnp.float32)                         # (Bb, L, S)

    mask = mask_ref[...]                             # (Bb, 1, S), 1.0 == masked
    logits = jnp.where(mask > 0.0, jnp.float32(-1e30), logits)

    # softmax over the context axis (f32 statistics, EUP reciprocal)
    m = jnp.max(logits, axis=-1, keepdims=True)
    e = jnp.exp(logits - m)
    attn = e * pl.reciprocal(jnp.sum(e, axis=-1, keepdims=True), approx=True)

    # weighted_context = bmm(attn, ctx)
    wc = jax.lax.dot_general(
        attn.astype(jnp.bfloat16), ctx_bf,
        dimension_numbers=(((2,), (1,)), ((0,), (0,))),
        preferred_element_type=jnp.float32)                         # (Bb, L, H)
    wc2_bf = wc.reshape(Bb * L, H).astype(jnp.bfloat16)

    # h_tilde = tanh(linear_out(cat(weighted_context, h)))
    h_tilde = jnp.tanh(
        jnp.dot(wc2_bf, wout_ref[0:H, :], preferred_element_type=jnp.float32)
        + jnp.dot(x2_bf, wout_ref[H:2 * H, :], preferred_element_type=jnp.float32))

    # logit = projection(h_tilde), vocab dim padded to a lane-dense multiple of 128
    out = (jnp.dot(h_tilde.astype(jnp.bfloat16), wproj_ref[...],
                   preferred_element_type=jnp.float32) + bproj_ref[...])
    out_ref[...] = out.reshape(Bb, L, -1).astype(out_ref.dtype)


def run_attn_proj(x, ctx, mask_f, w_in_bf, w_out_bf, w_proj_bf, b_proj_pad,
                  *, b_blk=None):
    # x: (B, L, H); ctx: (B, S, H); mask_f: (B, 1, S)
    B, L, H = x.shape
    S = ctx.shape[1]
    Vp = w_proj_bf.shape[1]
    if b_blk is None:
        b_blk = B
    assert B % b_blk == 0
    nb = B // b_blk

    return pl.pallas_call(
        attn_proj_kernel,
        out_shape=jax.ShapeDtypeStruct((B, L, Vp), jnp.float32),
        grid_spec=pltpu.PrefetchScalarGridSpec(
            num_scalar_prefetch=0,
            grid=(nb,),
            in_specs=[
                pl.BlockSpec((b_blk, L, H), lambda b: (b, 0, 0)),
                pl.BlockSpec((b_blk, S, H), lambda b: (b, 0, 0)),
                pl.BlockSpec((b_blk, 1, S), lambda b: (b, 0, 0)),
                pl.BlockSpec((H, H), lambda b: (0, 0)),
                pl.BlockSpec((2 * H, H), lambda b: (0, 0)),
                pl.BlockSpec((H, Vp), lambda b: (0, 0)),
                pl.BlockSpec((1, Vp), lambda b: (0, 0)),
            ],
            out_specs=pl.BlockSpec((b_blk, L, Vp), lambda b: (b, 0, 0)),
        ),
        compiler_params=pltpu.CompilerParams(
            dimension_semantics=("parallel",)),
    )(x, ctx, mask_f, w_in_bf, w_out_bf, w_proj_bf, b_proj_pad)


# ----------------------------------------------------------------------------
# Full SpeakerDecoder forward
# ----------------------------------------------------------------------------
def speaker_decoder_forward(params, words, ctx, ctx_mask, h0, c0, *, t_blk=8):
    """words: (B, L) int32; ctx: (B, S, H); ctx_mask: (B, S) bool;
    h0/c0: (1, B, H). Returns (logit (B, L, V), h1 (1, B, H), c1 (1, B, H))."""
    B, L = words.shape
    S = ctx.shape[1]
    H = params["w_hh_t"].shape[0]
    V = params["w_proj_t"].shape[1]
    V_pad = ((V + 127) // 128) * 128

    # --- one-time param prep (would be hoisted / jitted once in practice) ---
    # Fold W_ih and both LSTM biases into the embedding table; the gather then
    # yields the input-side gate pre-activations directly.
    emb_gates = params["embedding"] @ params["w_ih_t"] + params["bias"]  # (vocab, 4H)
    w_hh_bf = params["w_hh_t"].astype(jnp.bfloat16)
    w_in_bf = params["w_in_t"].astype(jnp.bfloat16)
    w_out_bf = params["w_out_t"].astype(jnp.bfloat16)
    w_proj_pad = jnp.zeros((H, V_pad), jnp.float32).at[:, :V].set(params["w_proj_t"])
    b_proj_pad = jnp.zeros((1, V_pad), jnp.float32).at[:, :V].set(params["b_proj"])
    w_proj_bf = w_proj_pad.astype(jnp.bfloat16)

    # time-major gather of pre-gates: (L, B, 4H) — no HBM transpose afterwards.
    xg = jnp.take(emb_gates, words.T, axis=0)

    # dropout is identity in eval mode.
    y, h1, c1 = run_lstm(xg, w_hh_bf, h0[0], c0[0], t_blk=min(t_blk, L))

    mask_f = ctx_mask.astype(jnp.float32).reshape(B, 1, S)
    logit_pad = run_attn_proj(y, ctx, mask_f, w_in_bf, w_out_bf,
                              w_proj_bf, b_proj_pad)                 # (B, L, V_pad)
    logit = logit_pad[..., :V]

    return logit, h1[None, ...], c1[None, ...]


# ----------------------------------------------------------------------------
# Pure-JAX f32 reference (for verification)
# ----------------------------------------------------------------------------
def reference_forward(params, words, ctx, ctx_mask, h0, c0):
    B, L = words.shape
    H = h0.shape[-1]
    embeds = jnp.take(params["embedding"], words, axis=0)

    def step(carry, x_t):
        h, c = carry
        gates = (x_t @ params["w_ih_t"] + h @ params["w_hh_t"] + params["bias"][0])
        i, f, g, o = jnp.split(gates, 4, axis=-1)
        c = jax.nn.sigmoid(f) * c + jax.nn.sigmoid(i) * jnp.tanh(g)
        h = jax.nn.sigmoid(o) * jnp.tanh(c)
        return (h, c), h

    (h1, c1), ys = jax.lax.scan(step, (h0[0], c0[0]),
                                jnp.transpose(embeds, (1, 0, 2)))
    x = jnp.transpose(ys, (1, 0, 2)).reshape(B * L, H)

    mult = L
    ctx_e = jnp.broadcast_to(ctx[:, None], (B, mult) + ctx.shape[1:]).reshape(B * L, -1, H)
    mask_e = jnp.broadcast_to(ctx_mask[:, None], (B, mult, ctx.shape[1])).reshape(B * L, -1)

    target = x @ params["w_in_t"]
    logits = jnp.einsum("nsh,nh->ns", ctx_e, target)
    logits = jnp.where(mask_e, -1e30, logits)
    attn = jax.nn.softmax(logits, axis=-1)
    wc = jnp.einsum("ns,nsh->nh", attn, ctx_e)
    h_tilde = jnp.tanh(jnp.concatenate([wc, x], axis=-1) @ params["w_out_t"])
    logit = h_tilde @ params["w_proj_t"] + params["b_proj"][0]
    return (logit.reshape(B, L, -1), h1[None], c1[None])


# ----------------------------------------------------------------------------
if __name__ == "__main__":
    # small shapes consistent with the module
    vocab_size, emb_size, hidden, padding_idx = 40, 32, 32, 0
    B, L, S = 2, 8, 8

    key = jax.random.PRNGKey(0)
    ks = jax.random.split(key, 12)

    def init(k, shape, scale=0.1):
        return (scale * jax.random.normal(k, shape)).astype(jnp.float32)

    emb = init(ks[0], (vocab_size, emb_size))
    emb = emb.at[padding_idx].set(0.0)                     # padding_idx row is zero

    params = {
        "embedding": emb,
        # LSTM: torch weight_ih (4H,E), weight_hh (4H,H) -> stored transposed
        "w_ih_t": init(ks[1], (emb_size, 4 * hidden)),
        "w_hh_t": init(ks[2], (hidden, 4 * hidden)),
        "bias": init(ks[3], (1, 4 * hidden)),              # b_ih + b_hh combined
        # SoftDotAttention: linear_in (H,H), linear_out (H,2H) -> transposed
        "w_in_t": init(ks[4], (hidden, hidden)),
        "w_out_t": init(ks[5], (2 * hidden, hidden)),
        # projection: (V,H) -> transposed, plus bias
        "w_proj_t": init(ks[6], (hidden, vocab_size)),
        "b_proj": init(ks[7], (1, vocab_size)),
    }

    words = jax.random.randint(ks[8], (B, L), 0, vocab_size).astype(jnp.int32)
    ctx = init(ks[9], (B, S, hidden), scale=1.0)
    # mask out the last two context positions of each batch element
    ctx_mask = (jnp.arange(S)[None, :] >= S - 2).astype(jnp.bool_)
    ctx_mask = jnp.broadcast_to(ctx_mask, (B, S))
    h0 = init(ks[10], (1, B, hidden), scale=0.5)
    c0 = init(ks[11], (1, B, hidden), scale=0.5)

    logit, h1, c1 = speaker_decoder_forward(params, words, ctx, ctx_mask, h0, c0)
    jax.block_until_ready((logit, h1, c1))

    ref_logit, ref_h1, ref_c1 = reference_forward(params, words, ctx, ctx_mask, h0, c0)
    assert logit.shape == (B, L, vocab_size)
    assert h1.shape == (1, B, hidden) and c1.shape == (1, B, hidden)
    # bf16 MXU operands -> compare against the f32 reference at 1e-2
    assert jnp.allclose(logit, ref_logit, atol=1e-2, rtol=1e-2)
    assert jnp.allclose(h1, ref_h1, atol=1e-2, rtol=1e-2)
    assert jnp.allclose(c1, ref_c1, atol=1e-2, rtol=1e-2)

    print("KERNEL_OK")
</pallas_src>

<mosaic_0001>
module attributes {stable_mosaic.version = 11 : i64} {
  func.func @lstm_kernel(%arg0: i32, %arg1: i32, %arg2: memref<8x2x128xf32, #tpu.memory_space<vmem>>, %arg3: memref<32x128xbf16, #tpu.memory_space<vmem>>, %arg4: memref<2x32xf32, #tpu.memory_space<vmem>>, %arg5: memref<2x32xf32, #tpu.memory_space<vmem>>, %arg6: memref<2x8x32xf32, #tpu.memory_space<vmem>>, %arg7: memref<2x32xf32, #tpu.memory_space<vmem>>, %arg8: memref<2x32xf32, #tpu.memory_space<vmem>>, %arg9: memref<2x32xf32, #tpu.memory_space<vmem>>, %arg10: memref<2x32xf32, #tpu.memory_space<vmem>>) attributes {dimension_semantics = [#tpu.dimension_semantics<parallel>, #tpu.dimension_semantics<arbitrary>], iteration_bounds = array<i64: 1, 1>, scalar_prefetch = 0 : i64, scratch_operands = 2 : i64, tpu.core_type = #tpu.core_type<tc>, window_params = [{transform_indices = @transform_0, window_bounds = array<i64: 8, 2, 128>}, {pipeline_mode = #tpu.pipeline_mode<synchronous>, transform_indices = @transform_1, window_bounds = array<i64: 32, 128>}, {transform_indices = @transform_2, window_bounds = array<i64: 2, 32>}, {transform_indices = @transform_3, window_bounds = array<i64: 2, 32>}, {transform_indices = @transform_4, window_bounds = array<i64: 2, 8, 32>}, {transform_indices = @transform_5, window_bounds = array<i64: 2, 32>}, {transform_indices = @transform_6, window_bounds = array<i64: 2, 32>}]} {
    %c0_i32 = arith.constant 0 : i32
    %0 = arith.cmpi eq, %arg1, %c0_i32 : i32
    %1 = arith.extui %0 : i1 to i32
    %c0_i32_0 = arith.constant 0 : i32
    %2 = arith.cmpi ne, %1, %c0_i32_0 : i32
    scf.if %2 {
      %c0_84 = arith.constant 0 : index
      %c0_85 = arith.constant 0 : index
      %275 = vector.load %arg4[%c0_84, %c0_85] : memref<2x32xf32, #tpu.memory_space<vmem>>, vector<2x32xf32>
      %c0_86 = arith.constant 0 : index
      %c0_87 = arith.constant 0 : index
      %276 = vector.load %arg9[%c0_86, %c0_87] : memref<2x32xf32, #tpu.memory_space<vmem>>, vector<2x32xf32>
      tpu.vector_store %arg9[%c0_86, %c0_87], %275 {strides = array<i32>} : memref<2x32xf32, #tpu.memory_space<vmem>>, vector<2x32xf32>,
      %c0_88 = arith.constant 0 : index
      %c0_89 = arith.constant 0 : index
      %277 = vector.load %arg5[%c0_88, %c0_89] : memref<2x32xf32, #tpu.memory_space<vmem>>, vector<2x32xf32>
      %c0_90 = arith.constant 0 : index
      %c0_91 = arith.constant 0 : index
      %278 = vector.load %arg10[%c0_90, %c0_91] : memref<2x32xf32, #tpu.memory_space<vmem>>, vector<2x32xf32>
      tpu.vector_store %arg10[%c0_90, %c0_91], %277 {strides = array<i32>} : memref<2x32xf32, #tpu.memory_space<vmem>>, vector<2x32xf32>,
    } else {
    }
    %c0 = arith.constant 0 : index
    %c0_1 = arith.constant 0 : index
    %3 = vector.load %arg3[%c0, %c0_1] : memref<32x128xbf16, #tpu.memory_space<vmem>>, vector<32x128xbf16>
    %c0_2 = arith.constant 0 : index
    %c0_3 = arith.constant 0 : index
    %4 = vector.load %arg9[%c0_2, %c0_3] : memref<2x32xf32, #tpu.memory_space<vmem>>, vector<2x32xf32>
    %c0_4 = arith.constant 0 : index
    %c0_5 = arith.constant 0 : index
    %5 = vector.load %arg10[%c0_4, %c0_5] : memref<2x32xf32, #tpu.memory_space<vmem>>, vector<2x32xf32>
    %c0_6 = arith.constant 0 : index
    %c0_7 = arith.constant 0 : index
    %c0_8 = arith.constant 0 : index
    %6 = vector.load %arg2[%c0_6, %c0_7, %c0_8] : memref<8x2x128xf32, #tpu.memory_space<vmem>>, vector<1x2x128xf32>
    %7 = vector.shape_cast %6 : vector<1x2x128xf32> to vector<2x128xf32>
    %8 = arith.truncf %4 : vector<2x32xf32> to vector<2x32xbf16>
    %cst = arith.constant dense<0.000000e+00> : vector<2x128xf32>
    %9 = tpu.matmul %8, %3, %cst {dimension_numbers = #tpu.dot_dimension_numbers<[1], [0], [0], [1], [0, 0, 1, 1], [], []>} : vector<2x32xbf16>, vector<32x128xbf16>, vector<2x128xf32> -> vector<2x128xf32>
    %10 = arith.addf %7, %9 : vector<2x128xf32>
    %11 = vector.extract_strided_slice %10 {offsets = [0, 0], sizes = [2, 32], strides = [1, 1]} : vector<2x128xf32> to vector<2x32xf32>
    %12 = arith.negf %11 : vector<2x32xf32>
    %13 = math.exp %12 : vector<2x32xf32>
    %cst_9 = arith.constant 1.000000e+00 : f32
    %14 = vector.broadcast %cst_9 : f32 to vector<2x32xf32>
    %15 = arith.addf %14, %13 : vector<2x32xf32>
    %16 = arith.divf %14, %15 : vector<2x32xf32>
    %17 = vector.extract_strided_slice %10 {offsets = [0, 32], sizes = [2, 32], strides = [1, 1]} : vector<2x128xf32> to vector<2x32xf32>
    %18 = arith.negf %17 : vector<2x32xf32>
    %19 = math.exp %18 : vector<2x32xf32>
    %cst_10 = arith.constant 1.000000e+00 : f32
    %20 = vector.broadcast %cst_10 : f32 to vector<2x32xf32>
    %21 = arith.addf %20, %19 : vector<2x32xf32>
    %22 = arith.divf %20, %21 : vector<2x32xf32>
    %23 = vector.extract_strided_slice %10 {offsets = [0, 64], sizes = [2, 32], strides = [1, 1]} : vector<2x128xf32> to vector<2x32xf32>
    %24 = math.tanh %23 : vector<2x32xf32>
    %25 = vector.extract_strided_slice %10 {offsets = [0, 96], sizes = [2, 32], strides = [1, 1]} : vector<2x128xf32> to vector<2x32xf32>
    %26 = arith.negf %25 : vector<2x32xf32>
    %27 = math.exp %26 : vector<2x32xf32>
    %cst_11 = arith.constant 1.000000e+00 : f32
    %28 = vector.broadcast %cst_11 : f32 to vector<2x32xf32>
    %29 = arith.addf %28, %27 : vector<2x32xf32>
    %30 = arith.divf %28, %29 : vector<2x32xf32>
    %31 = arith.mulf %22, %5 : vector<2x32xf32>
    %32 = arith.mulf %16, %24 : vector<2x32xf32>
    %33 = arith.addf %31, %32 : vector<2x32xf32>
    %34 = math.tanh %33 : vector<2x32xf32>
    %35 = arith.mulf %30, %34 : vector<2x32xf32>
    %c0_12 = arith.constant 0 : index
    %c0_13 = arith.constant 0 : index
    %c0_14 = arith.constant 0 : index
    %36 = vector.load %arg6[%c0_12, %c0_13, %c0_14] : memref<2x8x32xf32, #tpu.memory_space<vmem>>, vector<2x1x32xf32>
    %37 = vector.shape_cast %36 : vector<2x1x32xf32> to vector<2x32xf32>
    %38 = vector.shape_cast %35 : vector<2x32xf32> to vector<2x1x32xf32>
    tpu.vector_store %arg6[%c0_12, %c0_13, %c0_14], %38 {strides = array<i32>} : memref<2x8x32xf32, #tpu.memory_space<vmem>>, vector<2x1x32xf32>,
    %c1 = arith.constant 1 : index
    %c0_15 = arith.constant 0 : index
    %c0_16 = arith.constant 0 : index
    %39 = vector.load %arg2[%c1, %c0_15, %c0_16] : memref<8x2x128xf32, #tpu.memory_space<vmem>>, vector<1x2x128xf32>
    %40 = vector.shape_cast %39 : vector<1x2x128xf32> to vector<2x128xf32>
    %41 = arith.truncf %35 : vector<2x32xf32> to vector<2x32xbf16>
    %cst_17 = arith.constant dense<0.000000e+00> : vector<2x128xf32>
    %42 = tpu.matmul %41, %3, %cst_17 {dimension_numbers = #tpu.dot_dimension_numbers<[1], [0], [0], [1], [0, 0, 1, 1], [], []>} : vector<2x32xbf16>, vector<32x128xbf16>, vector<2x128xf32> -> vector<2x128xf32>
    %43 = arith.addf %40, %42 : vector<2x128xf32>
    %44 = vector.extract_strided_slice %43 {offsets = [0, 0], sizes = [2, 32], strides = [1, 1]} : vector<2x128xf32> to vector<2x32xf32>
    %45 = arith.negf %44 : vector<2x32xf32>
    %46 = math.exp %45 : vector<2x32xf32>
    %cst_18 = arith.constant 1.000000e+00 : f32
    %47 = vector.broadcast %cst_18 : f32 to vector<2x32xf32>
    %48 = arith.addf %47, %46 : vector<2x32xf32>
    %49 = arith.divf %47, %48 : vector<2x32xf32>
    %50 = vector.extract_strided_slice %43 {offsets = [0, 32], sizes = [2, 32], strides = [1, 1]} : vector<2x128xf32> to vector<2x32xf32>
    %51 = arith.negf %50 : vector<2x32xf32>
    %52 = math.exp %51 : vector<2x32xf32>
    %cst_19 = arith.constant 1.000000e+00 : f32
    %53 = vector.broadcast %cst_19 : f32 to vector<2x32xf32>
    %54 = arith.addf %53, %52 : vector<2x32xf32>
    %55 = arith.divf %53, %54 : vector<2x32xf32>
    %56 = vector.extract_strided_slice %43 {offsets = [0, 64], sizes = [2, 32], strides = [1, 1]} : vector<2x128xf32> to vector<2x32xf32>
    %57 = math.tanh %56 : vector<2x32xf32>
    %58 = vector.extract_strided_slice %43 {offsets = [0, 96], sizes = [2, 32], strides = [1, 1]} : vector<2x128xf32> to vector<2x32xf32>
    %59 = arith.negf %58 : vector<2x32xf32>
    %60 = math.exp %59 : vector<2x32xf32>
    %cst_20 = arith.constant 1.000000e+00 : f32
    %61 = vector.broadcast %cst_20 : f32 to vector<2x32xf32>
    %62 = arith.addf %61, %60 : vector<2x32xf32>
    %63 = arith.divf %61, %62 : vector<2x32xf32>
    %64 = arith.mulf %55, %33 : vector<2x32xf32>
    %65 = arith.mulf %49, %57 : vector<2x32xf32>
    %66 = arith.addf %64, %65 : vector<2x32xf32>
    %67 = math.tanh %66 : vector<2x32xf32>
    %68 = arith.mulf %63, %67 : vector<2x32xf32>
    %c0_21 = arith.constant 0 : index
    %c1_22 = arith.constant 1 : index
    %c0_23 = arith.constant 0 : index
    %69 = vector.load %arg6[%c0_21, %c1_22, %c0_23] : memref<2x8x32xf32, #tpu.memory_space<vmem>>, vector<2x1x32xf32>
    %70 = vector.shape_cast %69 : vector<2x1x32xf32> to vector<2x32xf32>
    %71 = vector.shape_cast %68 : vector<2x32xf32> to vector<2x1x32xf32>
    tpu.vector_store %arg6[%c0_21, %c1_22, %c0_23], %71 {strides = array<i32>} : memref<2x8x32xf32, #tpu.memory_space<vmem>>, vector<2x1x32xf32>,
    %c2 = arith.constant 2 : index
    %c0_24 = arith.constant 0 : index
    %c0_25 = arith.constant 0 : index
    %72 = vector.load %arg2[%c2, %c0_24, %c0_25] : memref<8x2x128xf32, #tpu.memory_space<vmem>>, vector<1x2x128xf32>
    %73 = vector.shape_cast %72 : vector<1x2x128xf32> to vector<2x128xf32>
    %74 = arith.truncf %68 : vector<2x32xf32> to vector<2x32xbf16>
    %cst_26 = arith.constant dense<0.000000e+00> : vector<2x128xf32>
    %75 = tpu.matmul %74, %3, %cst_26 {dimension_numbers = #tpu.dot_dimension_numbers<[1], [0], [0], [1], [0, 0, 1, 1], [], []>} : vector<2x32xbf16>, vector<32x128xbf16>, vector<2x128xf32> -> vector<2x128xf32>
    %76 = arith.addf %73, %75 : vector<2x128xf32>
    %77 = vector.extract_strided_slice %76 {offsets = [0, 0], sizes = [2, 32], strides = [1, 1]} : vector<2x128xf32> to vector<2x32xf32>
    %78 = arith.negf %77 : vector<2x32xf32>
    %79 = math.exp %78 : vector<2x32xf32>
    %cst_27 = arith.constant 1.000000e+00 : f32
    %80 = vector.broadcast %cst_27 : f32 to vector<2x32xf32>
    %81 = arith.addf %80, %79 : vector<2x32xf32>
    %82 = arith.divf %80, %81 : vector<2x32xf32>
    %83 = vector.extract_strided_slice %76 {offsets = [0, 32], sizes = [2, 32], strides = [1, 1]} : vector<2x128xf32> to vector<2x32xf32>
    %84 = arith.negf %83 : vector<2x32xf32>
    %85 = math.exp %84 : vector<2x32xf32>
    %cst_28 = arith.constant 1.000000e+00 : f32
    %86 = vector.broadcast %cst_28 : f32 to vector<2x32xf32>
    %87 = arith.addf %86, %85 : vector<2x32xf32>
    %88 = arith.divf %86, %87 : vector<2x32xf32>
    %89 = vector.extract_strided_slice %76 {offsets = [0, 64], sizes = [2, 32], strides = [1, 1]} : vector<2x128xf32> to vector<2x32xf32>
    %90 = math.tanh %89 : vector<2x32xf32>
    %91 = vector.extract_strided_slice %76 {offsets = [0, 96], sizes = [2, 32], strides = [1, 1]} : vector<2x128xf32> to vector<2x32xf32>
    %92 = arith.negf %91 : vector<2x32xf32>
    %93 = math.exp %92 : vector<2x32xf32>
    %cst_29 = arith.constant 1.000000e+00 : f32
    %94 = vector.broadcast %cst_29 : f32 to vector<2x32xf32>
    %95 = arith.addf %94, %93 : vector<2x32xf32>
    %96 = arith.divf %94, %95 : vector<2x32xf32>
    %97 = arith.mulf %88, %66 : vector<2x32xf32>
    %98 = arith.mulf %82, %90 : vector<2x32xf32>
    %99 = arith.addf %97, %98 : vector<2x32xf32>
    %100 = math.tanh %99 : vector<2x32xf32>
    %101 = arith.mulf %96, %100 : vector<2x32xf32>
    %c0_30 = arith.constant 0 : index
    %c2_31 = arith.constant 2 : index
    %c0_32 = arith.constant 0 : index
    %102 = vector.load %arg6[%c0_30, %c2_31, %c0_32] : memref<2x8x32xf32, #tpu.memory_space<vmem>>, vector<2x1x32xf32>
    %103 = vector.shape_cast %102 : vector<2x1x32xf32> to vector<2x32xf32>
    %104 = vector.shape_cast %101 : vector<2x32xf32> to vector<2x1x32xf32>
    tpu.vector_store %arg6[%c0_30, %c2_31, %c0_32], %104 {strides = array<i32>} : memref<2x8x32xf32, #tpu.memory_space<vmem>>, vector<2x1x32xf32>,
    %c3 = arith.constant 3 : index
    %c0_33 = arith.constant 0 : index
    %c0_34 = arith.constant 0 : index
    %105 = vector.load %arg2[%c3, %c0_33, %c0_34] : memref<8x2x128xf32, #tpu.memory_space<vmem>>, vector<1x2x128xf32>
    %106 = vector.shape_cast %105 : vector<1x2x128xf32> to vector<2x128xf32>
    %107 = arith.truncf %101 : vector<2x32xf32> to vector<2x32xbf16>
    %cst_35 = arith.constant dense<0.000000e+00> : vector<2x128xf32>
    %108 = tpu.matmul %107, %3, %cst_35 {dimension_numbers = #tpu.dot_dimension_numbers<[1], [0], [0], [1], [0, 0, 1, 1], [], []>} : vector<2x32xbf16>, vector<32x128xbf16>, vector<2x128xf32> -> vector<2x128xf32>
    %109 = arith.addf %106, %108 : vector<2x128xf32>
    %110 = vector.extract_strided_slice %109 {offsets = [0, 0], sizes = [2, 32], strides = [1, 1]} : vector<2x128xf32> to vector<2x32xf32>
    %111 = arith.negf %110 : vector<2x32xf32>
    %112 = math.exp %111 : vector<2x32xf32>
    %cst_36 = arith.constant 1.000000e+00 : f32
    %113 = vector.broadcast %cst_36 : f32 to vector<2x32xf32>
    %114 = arith.addf %113, %112 : vector<2x32xf32>
    %115 = arith.divf %113, %114 : vector<2x32xf32>
    %116 = vector.extract_strided_slice %109 {offsets = [0, 32], sizes = [2, 32], strides = [1, 1]} : vector<2x128xf32> to vector<2x32xf32>
    %117 = arith.negf %116 : vector<2x32xf32>
    %118 = math.exp %117 : vector<2x32xf32>
    %cst_37 = arith.constant 1.000000e+00 : f32
    %119 = vector.broadcast %cst_37 : f32 to vector<2x32xf32>
    %120 = arith.addf %119, %118 : vector<2x32xf32>
    %121 = arith.divf %119, %120 : vector<2x32xf32>
    %122 = vector.extract_strided_slice %109 {offsets = [0, 64], sizes = [2, 32], strides = [1, 1]} : vector<2x128xf32> to vector<2x32xf32>
    %123 = math.tanh %122 : vector<2x32xf32>
    %124 = vector.extract_strided_slice %109 {offsets = [0, 96], sizes = [2, 32], strides = [1, 1]} : vector<2x128xf32> to vector<2x32xf32>
    %125 = arith.negf %124 : vector<2x32xf32>
    %126 = math.exp %125 : vector<2x32xf32>
    %cst_38 = arith.constant 1.000000e+00 : f32
    %127 = vector.broadcast %cst_38 : f32 to vector<2x32xf32>
    %128 = arith.addf %127, %126 : vector<2x32xf32>
    %129 = arith.divf %127, %128 : vector<2x32xf32>
    %130 = arith.mulf %121, %99 : vector<2x32xf32>
    %131 = arith.mulf %115, %123 : vector<2x32xf32>
    %132 = arith.addf %130, %131 : vector<2x32xf32>
    %133 = math.tanh %132 : vector<2x32xf32>
    %134 = arith.mulf %129, %133 : vector<2x32xf32>
    %c0_39 = arith.constant 0 : index
    %c3_40 = arith.constant 3 : index
    %c0_41 = arith.constant 0 : index
    %135 = vector.load %arg6[%c0_39, %c3_40, %c0_41] : memref<2x8x32xf32, #tpu.memory_space<vmem>>, vector<2x1x32xf32>
    %136 = vector.shape_cast %135 : vector<2x1x32xf32> to vector<2x32xf32>
    %137 = vector.shape_cast %134 : vector<2x32xf32> to vector<2x1x32xf32>
    tpu.vector_store %arg6[%c0_39, %c3_40, %c0_41], %137 {strides = array<i32>} : memref<2x8x32xf32, #tpu.memory_space<vmem>>, vector<2x1x32xf32>,
    %c4 = arith.constant 4 : index
    %c0_42 = arith.constant 0 : index
    %c0_43 = arith.constant 0 : index
    %138 = vector.load %arg2[%c4, %c0_42, %c0_43] : memref<8x2x128xf32, #tpu.memory_space<vmem>>, vector<1x2x128xf32>
    %139 = vector.shape_cast %138 : vector<1x2x128xf32> to vector<2x128xf32>
    %140 = arith.truncf %134 : vector<2x32xf32> to vector<2x32xbf16>
    %cst_44 = arith.constant dense<0.000000e+00> : vector<2x128xf32>
    %141 = tpu.matmul %140, %3, %cst_44 {dimension_numbers = #tpu.dot_dimension_numbers<[1], [0], [0], [1], [0, 0, 1, 1], [], []>} : vector<2x32xbf16>, vector<32x128xbf16>, vector<2x128xf32> -> vector<2x128xf32>
    %142 = arith.addf %139, %141 : vector<2x128xf32>
    %143 = vector.extract_strided_slice %142 {offsets = [0, 0], sizes = [2, 32], strides = [1, 1]} : vector<2x128xf32> to vector<2x32xf32>
    %144 = arith.negf %143 : vector<2x32xf32>
    %145 = math.exp %144 : vector<2x32xf32>
    %cst_45 = arith.constant 1.000000e+00 : f32
    %146 = vector.broadcast %cst_45 : f32 to vector<2x32xf32>
    %147 = arith.addf %146, %145 : vector<2x32xf32>
    %148 = arith.divf %146, %147 : vector<2x32xf32>
    %149 = vector.extract_strided_slice %142 {offsets = [0, 32], sizes = [2, 32], strides = [1, 1]} : vector<2x128xf32> to vector<2x32xf32>
    %150 = arith.negf %149 : vector<2x32xf32>
    %151 = math.exp %150 : vector<2x32xf32>
    %cst_46 = arith.constant 1.000000e+00 : f32
    %152 = vector.broadcast %cst_46 : f32 to vector<2x32xf32>
    %153 = arith.addf %152, %151 : vector<2x32xf32>
    %154 = arith.divf %152, %153 : vector<2x32xf32>
    %155 = vector.extract_strided_slice %142 {offsets = [0, 64], sizes = [2, 32], strides = [1, 1]} : vector<2x128xf32> to vector<2x32xf32>
    %156 = math.tanh %155 : vector<2x32xf32>
    %157 = vector.extract_strided_slice %142 {offsets = [0, 96], sizes = [2, 32], strides = [1, 1]} : vector<2x128xf32> to vector<2x32xf32>
    %158 = arith.negf %157 : vector<2x32xf32>
    %159 = math.exp %158 : vector<2x32xf32>
    %cst_47 = arith.constant 1.000000e+00 : f32
    %160 = vector.broadcast %cst_47 : f32 to vector<2x32xf32>
    %161 = arith.addf %160, %159 : vector<2x32xf32>
    %162 = arith.divf %160, %161 : vector<2x32xf32>
    %163 = arith.mulf %154, %132 : vector<2x32xf32>
    %164 = arith.mulf %148, %156 : vector<2x32xf32>
    %165 = arith.addf %163, %164 : vector<2x32xf32>
    %166 = math.tanh %165 : vector<2x32xf32>
    %167 = arith.mulf %162, %166 : vector<2x32xf32>
    %c0_48 = arith.constant 0 : index
    %c4_49 = arith.constant 4 : index
    %c0_50 = arith.constant 0 : index
    %168 = vector.load %arg6[%c0_48, %c4_49, %c0_50] : memref<2x8x32xf32, #tpu.memory_space<vmem>>, vector<2x1x32xf32>
    %169 = vector.shape_cast %168 : vector<2x1x32xf32> to vector<2x32xf32>
    %170 = vector.shape_cast %167 : vector<2x32xf32> to vector<2x1x32xf32>
    tpu.vector_store %arg6[%c0_48, %c4_49, %c0_50], %170 {strides = array<i32>} : memref<2x8x32xf32, #tpu.memory_space<vmem>>, vector<2x1x32xf32>,
    %c5 = arith.constant 5 : index
    %c0_51 = arith.constant 0 : index
    %c0_52 = arith.constant 0 : index
    %171 = vector.load %arg2[%c5, %c0_51, %c0_52] : memref<8x2x128xf32, #tpu.memory_space<vmem>>, vector<1x2x128xf32>
    %172 = vector.shape_cast %171 : vector<1x2x128xf32> to vector<2x128xf32>
    %173 = arith.truncf %167 : vector<2x32xf32> to vector<2x32xbf16>
    %cst_53 = arith.constant dense<0.000000e+00> : vector<2x128xf32>
    %174 = tpu.matmul %173, %3, %cst_53 {dimension_numbers = #tpu.dot_dimension_numbers<[1], [0], [0], [1], [0, 0, 1, 1], [], []>} : vector<2x32xbf16>, vector<32x128xbf16>, vector<2x128xf32> -> vector<2x128xf32>
    %175 = arith.addf %172, %174 : vector<2x128xf32>
    %176 = vector.extract_strided_slice %175 {offsets = [0, 0], sizes = [2, 32], strides = [1, 1]} : vector<2x128xf32> to vector<2x32xf32>
    %177 = arith.negf %176 : vector<2x32xf32>
    %178 = math.exp %177 : vector<2x32xf32>
    %cst_54 = arith.constant 1.000000e+00 : f32
    %179 = vector.broadcast %cst_54 : f32 to vector<2x32xf32>
    %180 = arith.addf %179, %178 : vector<2x32xf32>
    %181 = arith.divf %179, %180 : vector<2x32xf32>
    %182 = vector.extract_strided_slice %175 {offsets = [0, 32], sizes = [2, 32], strides = [1, 1]} : vector<2x128xf32> to vector<2x32xf32>
    %183 = arith.negf %182 : vector<2x32xf32>
    %184 = math.exp %183 : vector<2x32xf32>
    %cst_55 = arith.constant 1.000000e+00 : f32
    %185 = vector.broadcast %cst_55 : f32 to vector<2x32xf32>
    %186 = arith.addf %185, %184 : vector<2x32xf32>
    %187 = arith.divf %185, %186 : vector<2x32xf32>
    %188 = vector.extract_strided_slice %175 {offsets = [0, 64], sizes = [2, 32], strides = [1, 1]} : vector<2x128xf32> to vector<2x32xf32>
    %189 = math.tanh %188 : vector<2x32xf32>
    %190 = vector.extract_strided_slice %175 {offsets = [0, 96], sizes = [2, 32], strides = [1, 1]} : vector<2x128xf32> to vector<2x32xf32>
    %191 = arith.negf %190 : vector<2x32xf32>
    %192 = math.exp %191 : vector<2x32xf32>
    %cst_56 = arith.constant 1.000000e+00 : f32
    %193 = vector.broadcast %cst_56 : f32 to vector<2x32xf32>
    %194 = arith.addf %193, %192 : vector<2x32xf32>
    %195 = arith.divf %193, %194 : vector<2x32xf32>
    %196 = arith.mulf %187, %165 : vector<2x32xf32>
    %197 = arith.mulf %181, %189 : vector<2x32xf32>
    %198 = arith.addf %196, %197 : vector<2x32xf32>
    %199 = math.tanh %198 : vector<2x32xf32>
    %200 = arith.mulf %195, %199 : vector<2x32xf32>
    %c0_57 = arith.constant 0 : index
    %c5_58 = arith.constant 5 : index
    %c0_59 = arith.constant 0 : index
    %201 = vector.load %arg6[%c0_57, %c5_58, %c0_59] : memref<2x8x32xf32, #tpu.memory_space<vmem>>, vector<2x1x32xf32>
    %202 = vector.shape_cast %201 : vector<2x1x32xf32> to vector<2x32xf32>
    %203 = vector.shape_cast %200 : vector<2x32xf32> to vector<2x1x32xf32>
    tpu.vector_store %arg6[%c0_57, %c5_58, %c0_59], %203 {strides = array<i32>} : memref<2x8x32xf32, #tpu.memory_space<vmem>>, vector<2x1x32xf32>,
    %c6 = arith.constant 6 : index
    %c0_60 = arith.constant 0 : index
    %c0_61 = arith.constant 0 : index
    %204 = vector.load %arg2[%c6, %c0_60, %c0_61] : memref<8x2x128xf32, #tpu.memory_space<vmem>>, vector<1x2x128xf32>
    %205 = vector.shape_cast %204 : vector<1x2x128xf32> to vector<2x128xf32>
    %206 = arith.truncf %200 : vector<2x32xf32> to vector<2x32xbf16>
    %cst_62 = arith.constant dense<0.000000e+00> : vector<2x128xf32>
    %207 = tpu.matmul %206, %3, %cst_62 {dimension_numbers = #tpu.dot_dimension_numbers<[1], [0], [0], [1], [0, 0, 1, 1], [], []>} : vector<2x32xbf16>, vector<32x128xbf16>, vector<2x128xf32> -> vector<2x128xf32>
    %208 = arith.addf %205, %207 : vector<2x128xf32>
    %209 = vector.extract_strided_slice %208 {offsets = [0, 0], sizes = [2, 32], strides = [1, 1]} : vector<2x128xf32> to vector<2x32xf32>
    %210 = arith.negf %209 : vector<2x32xf32>
    %211 = math.exp %210 : vector<2x32xf32>
    %cst_63 = arith.constant 1.000000e+00 : f32
    %212 = vector.broadcast %cst_63 : f32 to vector<2x32xf32>
    %213 = arith.addf %212, %211 : vector<2x32xf32>
    %214 = arith.divf %212, %213 : vector<2x32xf32>
    %215 = vector.extract_strided_slice %208 {offsets = [0, 32], sizes = [2, 32], strides = [1, 1]} : vector<2x128xf32> to vector<2x32xf32>
    %216 = arith.negf %215 : vector<2x32xf32>
    %217 = math.exp %216 : vector<2x32xf32>
    %cst_64 = arith.constant 1.000000e+00 : f32
    %218 = vector.broadcast %cst_64 : f32 to vector<2x32xf32>
    %219 = arith.addf %218, %217 : vector<2x32xf32>
    %220 = arith.divf %218, %219 : vector<2x32xf32>
    %221 = vector.extract_strided_slice %208 {offsets = [0, 64], sizes = [2, 32], strides = [1, 1]} : vector<2x128xf32> to vector<2x32xf32>
    %222 = math.tanh %221 : vector<2x32xf32>
    %223 = vector.extract_strided_slice %208 {offsets = [0, 96], sizes = [2, 32], strides = [1, 1]} : vector<2x128xf32> to vector<2x32xf32>
    %224 = arith.negf %223 : vector<2x32xf32>
    %225 = math.exp %224 : vector<2x32xf32>
    %cst_65 = arith.constant 1.000000e+00 : f32
    %226 = vector.broadcast %cst_65 : f32 to vector<2x32xf32>
    %227 = arith.addf %226, %225 : vector<2x32xf32>
    %228 = arith.divf %226, %227 : vector<2x32xf32>
    %229 = arith.mulf %220, %198 : vector<2x32xf32>
    %230 = arith.mulf %214, %222 : vector<2x32xf32>
    %231 = arith.addf %229, %230 : vector<2x32xf32>
    %232 = math.tanh %231 : vector<2x32xf32>
    %233 = arith.mulf %228, %232 : vector<2x32xf32>
    %c0_66 = arith.constant 0 : index
    %c6_67 = arith.constant 6 : index
    %c0_68 = arith.constant 0 : index
    %234 = vector.load %arg6[%c0_66, %c6_67, %c0_68] : memref<2x8x32xf32, #tpu.memory_space<vmem>>, vector<2x1x32xf32>
    %235 = vector.shape_cast %234 : vector<2x1x32xf32> to vector<2x32xf32>
    %236 = vector.shape_cast %233 : vector<2x32xf32> to vector<2x1x32xf32>
    tpu.vector_store %arg6[%c0_66, %c6_67, %c0_68], %236 {strides = array<i32>} : memref<2x8x32xf32, #tpu.memory_space<vmem>>, vector<2x1x32xf32>,
    %c7 = arith.constant 7 : index
    %c0_69 = arith.constant 0 : index
    %c0_70 = arith.constant 0 : index
    %237 = vector.load %arg2[%c7, %c0_69, %c0_70] : memref<8x2x128xf32, #tpu.memory_space<vmem>>, vector<1x2x128xf32>
    %238 = vector.shape_cast %237 : vector<1x2x128xf32> to vector<2x128xf32>
    %239 = arith.truncf %233 : vector<2x32xf32> to vector<2x32xbf16>
    %cst_71 = arith.constant dense<0.000000e+00> : vector<2x128xf32>
    %240 = tpu.matmul %239, %3, %cst_71 {dimension_numbers = #tpu.dot_dimension_numbers<[1], [0], [0], [1], [0, 0, 1, 1], [], []>} : vector<2x32xbf16>, vector<32x128xbf16>, vector<2x128xf32> -> vector<2x128xf32>
    %241 = arith.addf %238, %240 : vector<2x128xf32>
    %242 = vector.extract_strided_slice %241 {offsets = [0, 0], sizes = [2, 32], strides = [1, 1]} : vector<2x128xf32> to vector<2x32xf32>
    %243 = arith.negf %242 : vector<2x32xf32>
    %244 = math.exp %243 : vector<2x32xf32>
    %cst_72 = arith.constant 1.000000e+00 : f32
    %245 = vector.broadcast %cst_72 : f32 to vector<2x32xf32>
    %246 = arith.addf %245, %244 : vector<2x32xf32>
    %247 = arith.divf %245, %246 : vector<2x32xf32>
    %248 = vector.extract_strided_slice %241 {offsets = [0, 32], sizes = [2, 32], strides = [1, 1]} : vector<2x128xf32> to vector<2x32xf32>
    %249 = arith.negf %248 : vector<2x32xf32>
    %250 = math.exp %249 : vector<2x32xf32>
    %cst_73 = arith.constant 1.000000e+00 : f32
    %251 = vector.broadcast %cst_73 : f32 to vector<2x32xf32>
    %252 = arith.addf %251, %250 : vector<2x32xf32>
    %253 = arith.divf %251, %252 : vector<2x32xf32>
    %254 = vector.extract_strided_slice %241 {offsets = [0, 64], sizes = [2, 32], strides = [1, 1]} : vector<2x128xf32> to vector<2x32xf32>
    %255 = math.tanh %254 : vector<2x32xf32>
    %256 = vector.extract_strided_slice %241 {offsets = [0, 96], sizes = [2, 32], strides = [1, 1]} : vector<2x128xf32> to vector<2x32xf32>
    %257 = arith.negf %256 : vector<2x32xf32>
    %258 = math.exp %257 : vector<2x32xf32>
    %cst_74 = arith.constant 1.000000e+00 : f32
    %259 = vector.broadcast %cst_74 : f32 to vector<2x32xf32>
    %260 = arith.addf %259, %258 : vector<2x32xf32>
    %261 = arith.divf %259, %260 : vector<2x32xf32>
    %262 = arith.mulf %253, %231 : vector<2x32xf32>
    %263 = arith.mulf %247, %255 : vector<2x32xf32>
    %264 = arith.addf %262, %263 : vector<2x32xf32>
    %265 = math.tanh %264 : vector<2x32xf32>
    %266 = arith.mulf %261, %265 : vector<2x32xf32>
    %c0_75 = arith.constant 0 : index
    %c7_76 = arith.constant 7 : index
    %c0_77 = arith.constant 0 : index
    %267 = vector.load %arg6[%c0_75, %c7_76, %c0_77] : memref<2x8x32xf32, #tpu.memory_space<vmem>>, vector<2x1x32xf32>
    %268 = vector.shape_cast %267 : vector<2x1x32xf32> to vector<2x32xf32>
    %269 = vector.shape_cast %266 : vector<2x32xf32> to vector<2x1x32xf32>
    tpu.vector_store %arg6[%c0_75, %c7_76, %c0_77], %269 {strides = array<i32>} : memref<2x8x32xf32, #tpu.memory_space<vmem>>, vector<2x1x32xf32>,
    %c0_78 = arith.constant 0 : index
    %c0_79 = arith.constant 0 : index
    %270 = vector.load %arg9[%c0_78, %c0_79] : memref<2x32xf32, #tpu.memory_space<vmem>>, vector<2x32xf32>
    tpu.vector_store %arg9[%c0_78, %c0_79], %266 {strides = array<i32>} : memref<2x32xf32, #tpu.memory_space<vmem>>, vector<2x32xf32>,
    %c0_80 = arith.constant 0 : index
    %c0_81 = arith.constant 0 : index
    %271 = vector.load %arg10[%c0_80, %c0_81] : memref<2x32xf32, #tpu.memory_space<vmem>>, vector<2x32xf32>
    tpu.vector_store %arg10[%c0_80, %c0_81], %264 {strides = array<i32>} : memref<2x32xf32, #tpu.memory_space<vmem>>, vector<2x32xf32>,
    %c0_i32_82 = arith.constant 0 : i32
    %272 = arith.cmpi eq, %arg1, %c0_i32_82 : i32
    %273 = arith.extui %272 : i1 to i32
    %c0_i32_83 = arith.constant 0 : i32
    %274 = arith.cmpi ne, %273, %c0_i32_83 : i32
    scf.if %274 {
      %c0_84 = arith.constant 0 : index
      %c0_85 = arith.constant 0 : index
      %275 = vector.load %arg7[%c0_84, %c0_85] : memref<2x32xf32, #tpu.memory_space<vmem>>, vector<2x32xf32>
      tpu.vector_store %arg7[%c0_84, %c0_85], %266 {strides = array<i32>} : memref<2x32xf32, #tpu.memory_space<vmem>>, vector<2x32xf32>,
      %c0_86 = arith.constant 0 : index
      %c0_87 = arith.constant 0 : index
      %276 = vector.load %arg8[%c0_86, %c0_87] : memref<2x32xf32, #tpu.memory_space<vmem>>, vector<2x32xf32>
      tpu.vector_store %arg8[%c0_86, %c0_87], %264 {strides = array<i32>} : memref<2x32xf32, #tpu.memory_space<vmem>>, vector<2x32xf32>,
    } else {
    }
    return
  }
  func.func @transform_0(%arg0: i32, %arg1: i32) -> (i32, i32, i32) {
    %c0_i32 = arith.constant 0 : i32
    %c0_i32_0 = arith.constant 0 : i32
    return %arg1, %arg0, %c0_i32 : i32, i32, i32
  }
  func.func @transform_1(%arg0: i32, %arg1: i32) -> (i32, i32) {
    %c0_i32 = arith.constant 0 : i32
    %c0_i32_0 = arith.constant 0 : i32
    %c0_i32_1 = arith.constant 0 : i32
    return %c0_i32, %c0_i32_0 : i32, i32
  }
  func.func @transform_2(%arg0: i32, %arg1: i32) -> (i32, i32) {
    %c0_i32 = arith.constant 0 : i32
    %c0_i32_0 = arith.constant 0 : i32
    return %arg0, %c0_i32 : i32, i32
  }
  func.func @transform_3(%arg0: i32, %arg1: i32) -> (i32, i32) {
    %c0_i32 = arith.constant 0 : i32
    %c0_i32_0 = arith.constant 0 : i32
    return %arg0, %c0_i32 : i32, i32
  }
  func.func @transform_4(%arg0: i32, %arg1: i32) -> (i32, i32, i32) {
    %c0_i32 = arith.constant 0 : i32
    %c0_i32_0 = arith.constant 0 : i32
    return %arg0, %arg1, %c0_i32 : i32, i32, i32
  }
  func.func @transform_5(%arg0: i32, %arg1: i32) -> (i32, i32) {
    %c0_i32 = arith.constant 0 : i32
    %c0_i32_0 = arith.constant 0 : i32
    return %arg0, %c0_i32 : i32, i32
  }
  func.func @transform_6(%arg0: i32, %arg1: i32) -> (i32, i32) {
    %c0_i32 = arith.constant 0 : i32
    %c0_i32_0 = arith.constant 0 : i32
    return %arg0, %c0_i32 : i32, i32
  }
}

</mosaic_0001>

<llo_original>
// kernel: tpu_custom_call.1
$region0: #{tpu_custom_call.1}
  #allocation0 [shape = 'u32[]', space=smem, size = 0x4, offset = 0x4, fixed_abs, tag = 'smem constant byte address 0x4 - core index']
  #allocation1 [shape = 'u32[72,128]{1,0:T(1,128)}', space=vmem, size = 0x9000, scoped, tag = 'internal scratch']
  #allocation2 [shape = 'f32[2,32]{1,0:T(2,128)}', space=vmem, size = 0x400, scoped, tag = 'scratch operand']
  #allocation3 [shape = 'f32[2,32]{1,0:T(2,128)}', space=vmem, size = 0x400, scoped, tag = 'scratch operand']
  %s0 = inlined_call_operand.hbm [shape: f32[8,2,128], index: 0, kind: input, shape index: {}]
  %s1 = inlined_call_operand.hbm [shape: bf16[32,128], index: 1, kind: input, shape index: {}]
  %s2 = inlined_call_operand.hbm [shape: f32[2,32], index: 2, kind: input, shape index: {}]
  %s3 = inlined_call_operand.vmem [shape: f32[2,32], index: 3, kind: input, shape index: {}]
  %s4 = inlined_call_operand.hbm [shape: f32[2,8,32], index: 4, kind: output, shape index: {0}]
  %s5 = inlined_call_operand.hbm [shape: f32[2,32], index: 5, kind: output, shape index: {1}]
  %s6 = inlined_call_operand.hbm [shape: f32[2,32], index: 6, kind: output, shape index: {2}]
  %7 = xla_tuple %s4, %s5, %s6
  %s8 = sld [smem:[#allocation0]]
  $region62: #{tpu_custom_call.1} parent=0
    _
  %s10 = ssub.s32 1, %s8
  %s11 = scalar_select 0, %s10, %s8
  $region1: #{tpu_custom_call.1} parent=0
    #allocation4 [shape = 'u8[8192]{0}', space=vmem, size = 0x2000, scoped, tag = 'input window, operand 0, single buffered']
    #allocation5 [shape = 's32[1]{0}', space=sflag, size = 0x4, scoped, tag = 'scoped memory for tpu_custom_call.1']
    #allocation6 [shape = 's32[1]{0}', space=sflag, size = 0x4, scoped, tag = 'scoped memory for tpu_custom_call.1']
    #allocation7 [shape = 'u8[8192]{0}', space=vmem, size = 0x2000, scoped, tag = 'input window, operand 1, single buffered']
    #allocation8 [shape = 's32[1]{0}', space=sflag, size = 0x4, scoped, tag = 'scoped memory for tpu_custom_call.1']
    #allocation9 [shape = 'u8[1024]{0}', space=vmem, size = 0x400, scoped, tag = 'input window, operand 2, single buffered']
    #allocation10 [shape = 'u8[8192]{0}', space=vmem, size = 0x2000, scoped, tag = 'output window, operand 0, single buffered']
    #allocation11 [shape = 'u8[1024]{0}', space=vmem, size = 0x400, scoped, tag = 'output window, operand 1, single buffered']
    #allocation12 [shape = 's32[1]{0}', space=sflag, size = 0x4, scoped, tag = 'scoped memory for tpu_custom_call.1']
    #allocation13 [shape = 'u8[1024]{0}', space=vmem, size = 0x400, scoped, tag = 'output window, operand 2, single buffered']
    %12 = vsyncpa [#allocation5], 0
    %13 = vsyncpa [#allocation8], 0
    %14 = vsyncpa [#allocation6], 0
    %15 = vsyncpa [#allocation12], 0
    // Predicated region
    $region2: #{tpu_custom_call.1} parent=1 // pred_check
      _
    $region3: #{tpu_custom_call.1} parent=1 // pred_check_branch
      %17 = sbr.rel (0) target = $region5
    $region4: #{tpu_custom_call.1} parent=1 // pred_region
      %19 = vsyncadd [#allocation5], 0
      %s20 = sshll.u32 %s0, 4
      %s21 = int_to_ptr.hbm [resolvable:$true] %s20
      %s22 = sshll.u32 [#allocation4], 4
      %s23 = int_to_ptr.vmem [resolvable:$true] %s22
      %28 = dma.hbm_to_vmem [thread:$0]  %s21, 256, %s23, [#allocation5], 32, 32, 2
    $region5: #{tpu_custom_call.1} parent=1 // pred_fallthru
      _
    // Predicated region
    $region6: #{tpu_custom_call.1} parent=1 // pred_check
      _
    $region7: #{tpu_custom_call.1} parent=1 // pred_check_branch
      %30 = sbr.rel (0) target = $region9
    $region8: #{tpu_custom_call.1} parent=1 // pred_region
      %32 = vsyncadd [#allocation8], 0
      %s33 = sshll.u32 %s1, 4
      %s34 = int_to_ptr.hbm [resolvable:$true] %s33
      %s35 = sshll.u32 [#allocation7], 4
      %s36 = int_to_ptr.vmem [resolvable:$true] %s35
      %41 = dma.hbm_to_vmem [thread:$0]  %s34, 256, %s36, [#allocation8], 64, 64, 4
    $region9: #{tpu_custom_call.1} parent=1 // pred_fallthru
      _
    // Predicated region
    $region10: #{tpu_custom_call.1} parent=1 // pred_check
      _
    $region11: #{tpu_custom_call.1} parent=1 // pred_check_branch
      %43 = sbr.rel (0) target = $region13
    $region12: #{tpu_custom_call.1} parent=1 // pred_region
      %45 = vsyncadd [#allocation8], 0
      %s47 = sshll.u32 %s2, 4
      %s48 = int_to_ptr.hbm [resolvable:$true] %s47
      %s49 = sshll.u32 [#allocation9], 4
      %s50 = int_to_ptr.vmem [resolvable:$true] %s49
      %52 = dma.hbm_to_vmem [thread:$0]  %s48, 32, %s50, [#allocation8]
    $region13: #{tpu_custom_call.1} parent=1 // pred_fallthru
      _
    // Predicated region
    $region14: #{tpu_custom_call.1} parent=1 // pred_check
      _
    $region15: #{tpu_custom_call.1} parent=1 // pred_check_branch
      %54 = sbr.rel (0) target = $region17
    $region16: #{tpu_custom_call.1} parent=1 // pred_region
      _
    $region17: #{tpu_custom_call.1} parent=1 // pred_fallthru
      _
    // Predicated region
    $region18: #{tpu_custom_call.1} parent=1 // pred_check
      _
    $region19: #{tpu_custom_call.1} parent=1 // pred_check_branch
      %56 = sbr.rel (0) target = $region21
    $region20: #{tpu_custom_call.1} parent=1 // pred_region
      %58 = dma.done [#allocation5], 256
    $region21: #{tpu_custom_call.1} parent=1 // pred_fallthru
      _
    // Predicated region
    $region22: #{tpu_custom_call.1} parent=1 // pred_check
      _
    $region23: #{tpu_custom_call.1} parent=1 // pred_check_branch
      %60 = sbr.rel (0) target = $region25
    $region24: #{tpu_custom_call.1} parent=1 // pred_region
      %62 = dma.done [#allocation8], 256
    $region25: #{tpu_custom_call.1} parent=1 // pred_fallthru
      _
    // Predicated region
    $region26: #{tpu_custom_call.1} parent=1 // pred_check
      _
    $region27: #{tpu_custom_call.1} parent=1 // pred_check_branch
      %64 = sbr.rel (0) target = $region29
    $region28: #{tpu_custom_call.1} parent=1 // pred_region
      %66 = dma.done [#allocation8], 32
    $region29: #{tpu_custom_call.1} parent=1 // pred_fallthru
      _
    %p68 = scmp.eq.s32.totalorder 0, 0
    // Predicated region
    $region30: #{tpu_custom_call.1} parent=1 // pred_check
      %p69 = pneg %p68
    $region31: #{tpu_custom_call.1} parent=1 // pred_check_branch
      %71 = sbr.rel (%p69) target = $region33
    $region32: #{tpu_custom_call.1} parent=1 // pred_region
      %v72 = vld [vmem:[#allocation9] sm:$0x3]
      %vm73 = vcmask 254976
      %74 = vst.msk [vmem:[#allocation2] sm:$0x3] %vm73, %v72
      %v75 = vld [vmem:[%s3] sm:$0x3]
      %76 = vst.msk [vmem:[#allocation3] sm:$0x3] %vm73, %v75
    $region33: #{tpu_custom_call.1} parent=1 // pred_fallthru
      _
    %v77 = vld [vmem:[#allocation7] sm:$0xf]
    %v78 = vld [vmem:[#allocation7 + $0x4] sm:$0xf]
    %v79 = vld [vmem:[#allocation7 + $0x8] sm:$0xf]
    %v80 = vld [vmem:[#allocation7 + $0xc] sm:$0xf]
    %v81 = vld [vmem:[#allocation2] sm:$0x3]
    %v82 = vld [vmem:[#allocation3] sm:$0x3]
    %v83 = vld [vmem:[#allocation4] sm:$0x3]
    %v84 = vpack.c.bf16 %v81, %v81
    %v89 = vunpack.c.l.b16 %v77
    %v90 = vunpack.c.l.b16 %v78
    %v91 = vunpack.c.l.b16 %v79
    %v92 = vunpack.c.l.b16 %v80
    %v93 = vpack.c.b16 %v90, %v89
    %v94 = vpack.c.b16 %v92, %v91
    %vm97 = vcmask 261120
    %v99 = vsel %vm97, %v84, 0
    %101 = vmatpush.bf16.msra.mxu0 0
    %102 = vmatpush.bf16.msra.mxu0 0
    %103 = vmatpush.bf16.msra.mxu0 0
    %104 = vmatpush.bf16.msra.mxu0 0
    %105 = vmatpush.bf16.msra.mxu0 0
    %106 = vmatpush.bf16.msra.mxu0 0
    %107 = vmatpush.bf16.msra.mxu0 %v94
    %108 = vmatpush.bf16.msra.mxu0 %v93
    %109 = vmatmul.bf16.gmra.mxu0 %v99
    %v110 = vpop.f32.mrf.mxu0
    %v111 = vadd.f32 0.0, %v110
    %v112 = vpop.f32.mrf.mxu0
    %113 = vdwg.mxu0
    %v114 = vadd.f32 %v83, %v111
    %v115 = vxor.u32 %v114, 2147483648
    %v116 = vmul.f32 %v115, 1.442695
    %v117 = vpow.pop %v116
    %v118 = vadd.f32 %v117, 1.0
    %v119 = vrcp.pop %v118
    %v120 = vmul.f32 %v118, %v119
    %v121 = vsub.f32 1.0, %v120
    %v122 = vmul.f32 %v119, %v121
    %v123 = vadd.f32 %v119, %v122
    %vm124 = vweird.f32 %v118
    %vm125 = vweird.f32 %v119
    %vm126 = vmor %vm124, %vm125
    %v127 = vsel %vm126, %v119, %v123
    %v128 = vand.u32 2147483647, %v118
    %vm129 = vcmp.eq.f32.partialorder %v128, 8.507059e+37
    %v130 = vand.u32 %v118, 2147483648
    %v131 = vor.u32 1.1754944e-38, %v130
    %v132 = vsel %vm129, %v131, %v127
    %v133 = vmul.f32 1.0, %v132
    %v134 = vtanh.pop %v114
    %136 = vrot.lane.b32.xlu0 %v82, 32
    %v137 = vpop.permute.xlu0 %136
    %v139 = vmul.f32 %v133, %v137
    %141 = vrot.lane.b32.xlu0 %v134, 64
    %v142 = vpop.permute.xlu0 %141
    %v144 = vmul.f32 %v133, %v142
    %146 = vrot.lane.b32.xlu0 %v144, 32
    %v147 = vpop.permute.xlu0 %146
    %v149 = vadd.f32 %v139, %v147
    %v150 = vtanh.pop %v149
    %152 = vrot.lane.b32.xlu0 %v150, 64
    %v153 = vpop.permute.xlu0 %152
    %v155 = vmul.f32 %v133, %v153
    %v157 = vrot.slane %v155, 1
    %v158 = vperm.slane %v155, 0
    %v159 = vperm.slane %v157, 0
    %160 = vrot.lane.b32.xlu0 %v158, 32
    %v161 = vpop.permute.xlu0 %160
    %162 = vrot.lane.b32.xlu0 %v159, 32
    %v163 = vpop.permute.xlu0 %162
    %vm166 = vcmask 253952
    %167 = vst.msk [vmem:[#allocation10] sm:$0x1] %vm166, %v161
    %168 = vst.msk [vmem:[#allocation10 + $0x8] sm:$0x1] %vm166, %v163
    %s169 = scalar_lea.vmem [#allocation4], 2
    %v170 = vld [vmem:[%s169] sm:$0x3]
    %v171 = vpack.c.bf16 %v155, %v155
    %173 = vrot.lane.b32.xlu0 %v171, 32
    %v174 = vpop.permute.xlu0 %173
    %v176 = vsel %vm97, %v174, 0
    %178 = vmatpush.bf16.msra.mxu0 0
    %179 = vmatpush.bf16.msra.mxu0 0
    %180 = vmatpush.bf16.msra.mxu0 0
    %181 = vmatpush.bf16.msra.mxu0 0
    %182 = vmatpush.bf16.msra.mxu0 0
    %183 = vmatpush.bf16.msra.mxu0 0
    %184 = vmatpush.bf16.msra.mxu0 %v94
    %185 = vmatpush.bf16.msra.mxu0 %v93
    %186 = vmatmul.bf16.gmra.mxu0 %v176
    %v187 = vpop.f32.mrf.mxu0
    %v188 = vadd.f32 0.0, %v187
    %v189 = vpop.f32.mrf.mxu0
    %190 = vdwg.mxu0
    %v191 = vadd.f32 %v170, %v188
    %v192 = vxor.u32 %v191, 2147483648
    %v193 = vmul.f32 %v192, 1.442695
    %v194 = vpow.pop %v193
    %v195 = vadd.f32 %v194, 1.0
    %v196 = vrcp.pop %v195
    %v197 = vmul.f32 %v195, %v196
    %v198 = vsub.f32 1.0, %v197
    %v199 = vmul.f32 %v196, %v198
    %v200 = vadd.f32 %v196, %v199
    %vm201 = vweird.f32 %v195
    %vm202 = vweird.f32 %v196
    %vm203 = vmor %vm201, %vm202
    %v204 = vsel %vm203, %v196, %v200
    %v205 = vand.u32 2147483647, %v195
    %vm206 = vcmp.eq.f32.partialorder %v205, 8.507059e+37
    %v207 = vand.u32 %v195, 2147483648
    %v208 = vor.u32 1.1754944e-38, %v207
    %v209 = vsel %vm206, %v208, %v204
    %v210 = vmul.f32 1.0, %v209
    %v211 = vtanh.pop %v191
    %v212 = vmul.f32 %v210, %v149
    %214 = vrot.lane.b32.xlu0 %v211, 64
    %v215 = vpop.permute.xlu0 %214
    %v217 = vmul.f32 %v210, %v215
    %219 = vrot.lane.b32.xlu0 %v217, 32
    %v220 = vpop.permute.xlu0 %219
    %v222 = vadd.f32 %v212, %v220
    %v223 = vtanh.pop %v222
    %225 = vrot.lane.b32.xlu0 %v223, 64
    %v226 = vpop.permute.xlu0 %225
    %v228 = vmul.f32 %v210, %v226
    %v230 = vrot.slane %v228, 1
    %v231 = vperm.slane %v228, 0
    %v232 = vperm.slane %v230, 0
    %233 = vrot.lane.b32.xlu0 %v231, 32
    %v234 = vpop.permute.xlu0 %233
    %235 = vrot.lane.b32.xlu0 %v232, 32
    %v236 = vpop.permute.xlu0 %235
    %239 = vst.msk [vmem:[#allocation10 + $0x1] sm:$0x1] %vm166, %v234
    %240 = vst.msk [vmem:[#allocation10 + $0x9] sm:$0x1] %vm166, %v236
    %s241 = scalar_lea.vmem [#allocation4], 4
    %v242 = vld [vmem:[%s241] sm:$0x3]
    %v243 = vpack.c.bf16 %v228, %v228
    %245 = vrot.lane.b32.xlu0 %v243, 32
    %v246 = vpop.permute.xlu0 %245
    %v248 = vsel %vm97, %v246, 0
    %250 = vmatpush.bf16.msra.mxu0 0
    %251 = vmatpush.bf16.msra.mxu0 0
    %252 = vmatpush.bf16.msra.mxu0 0
    %253 = vmatpush.bf16.msra.mxu0 0
    %254 = vmatpush.bf16.msra.mxu0 0
    %255 = vmatpush.bf16.msra.mxu0 0
    %256 = vmatpush.bf16.msra.mxu0 %v94
    %257 = vmatpush.bf16.msra.mxu0 %v93
    %258 = vmatmul.bf16.gmra.mxu0 %v248
    %v259 = vpop.f32.mrf.mxu0
    %v260 = vadd.f32 0.0, %v259
    %v261 = vpop.f32.mrf.mxu0
    %262 = vdwg.mxu0
    %v263 = vadd.f32 %v242, %v260
    %v264 = vxor.u32 %v263, 2147483648
    %v265 = vmul.f32 %v264, 1.442695
    %v266 = vpow.pop %v265
    %v267 = vadd.f32 %v266, 1.0
    %v268 = vrcp.pop %v267
    %v269 = vmul.f32 %v267, %v268
    %v270 = vsub.f32 1.0, %v269
    %v271 = vmul.f32 %v268, %v270
    %v272 = vadd.f32 %v268, %v271
    %vm273 = vweird.f32 %v267
    %vm274 = vweird.f32 %v268
    %vm275 = vmor %vm273, %vm274
    %v276 = vsel %vm275, %v268, %v272
    %v277 = vand.u32 2147483647, %v267
    %vm278 = vcmp.eq.f32.partialorder %v277, 8.507059e+37
    %v279 = vand.u32 %v267, 2147483648
    %v280 = vor.u32 1.1754944e-38, %v279
    %v281 = vsel %vm278, %v280, %v276
    %v282 = vmul.f32 1.0, %v281
    %v283 = vtanh.pop %v263
    %v284 = vmul.f32 %v282, %v222
    %286 = vrot.lane.b32.xlu0 %v283, 64
    %v287 = vpop.permute.xlu0 %286
    %v289 = vmul.f32 %v282, %v287
    %291 = vrot.lane.b32.xlu0 %v289, 32
    %v292 = vpop.permute.xlu0 %291
    %v294 = vadd.f32 %v284, %v292
    %v295 = vtanh.pop %v294
    %297 = vrot.lane.b32.xlu0 %v295, 64
    %v298 = vpop.permute.xlu0 %297
    %v300 = vmul.f32 %v282, %v298
    %v302 = vrot.slane %v300, 1
    %v303 = vperm.slane %v300, 0
    %v304 = vperm.slane %v302, 0
    %305 = vrot.lane.b32.xlu0 %v303, 32
    %v306 = vpop.permute.xlu0 %305
    %307 = vrot.lane.b32.xlu0 %v304, 32
    %v308 = vpop.permute.xlu0 %307
    %311 = vst.msk [vmem:[#allocation10 + $0x2] sm:$0x1] %vm166, %v306
    %312 = vst.msk [vmem:[#allocation10 + $0xa] sm:$0x1] %vm166, %v308
    %s313 = scalar_lea.vmem [#allocation4], 6
    %v314 = vld [vmem:[%s313] sm:$0x3]
    %v315 = vpack.c.bf16 %v300, %v300
    %317 = vrot.lane.b32.xlu0 %v315, 32
    %v318 = vpop.permute.xlu0 %317
    %v320 = vsel %vm97, %v318, 0
    %322 = vmatpush.bf16.msra.mxu0 0
    %323 = vmatpush.bf16.msra.mxu0 0
    %324 = vmatpush.bf16.msra.mxu0 0
    %325 = vmatpush.bf16.msra.mxu0 0
    %326 = vmatpush.bf16.msra.mxu0 0
    %327 = vmatpush.bf16.msra.mxu0 0
    %328 = vmatpush.bf16.msra.mxu0 %v94
    %329 = vmatpush.bf16.msra.mxu0 %v93
    %330 = vmatmul.bf16.gmra.mxu0 %v320
    %v331 = vpop.f32.mrf.mxu0
    %v332 = vadd.f32 0.0, %v331
    %v333 = vpop.f32.mrf.mxu0
    %334 = vdwg.mxu0
    %v335 = vadd.f32 %v314, %v332
    %v336 = vxor.u32 %v335, 2147483648
    %v337 = vmul.f32 %v336, 1.442695
    %v338 = vpow.pop %v337
    %v339 = vadd.f32 %v338, 1.0
    %v340 = vrcp.pop %v339
    %v341 = vmul.f32 %v339, %v340
    %v342 = vsub.f32 1.0, %v341
    %v343 = vmul.f32 %v340, %v342
    %v344 = vadd.f32 %v340, %v343
    %vm345 = vweird.f32 %v339
    %vm346 = vweird.f32 %v340
    %vm347 = vmor %vm345, %vm346
    %v348 = vsel %vm347, %v340, %v344
    %v349 = vand.u32 2147483647, %v339
    %vm350 = vcmp.eq.f32.partialorder %v349, 8.507059e+37
    %v351 = vand.u32 %v339, 2147483648
    %v352 = vor.u32 1.1754944e-38, %v351
    %v353 = vsel %vm350, %v352, %v348
    %v354 = vmul.f32 1.0, %v353
    %v355 = vtanh.pop %v335
    %v356 = vmul.f32 %v354, %v294
    %358 = vrot.lane.b32.xlu0 %v355, 64
    %v359 = vpop.permute.xlu0 %358
    %v361 = vmul.f32 %v354, %v359
    %363 = vrot.lane.b32.xlu0 %v361, 32
    %v364 = vpop.permute.xlu0 %363
    %v366 = vadd.f32 %v356, %v364
    %v367 = vtanh.pop %v366
    %369 = vrot.lane.b32.xlu0 %v367, 64
    %v370 = vpop.permute.xlu0 %369
    %v372 = vmul.f32 %v354, %v370
    %v374 = vrot.slane %v372, 1
    %v375 = vperm.slane %v372, 0
    %v376 = vperm.slane %v374, 0
    %377 = vrot.lane.b32.xlu0 %v375, 32
    %v378 = vpop.permute.xlu0 %377
    %379 = vrot.lane.b32.xlu0 %v376, 32
    %v380 = vpop.permute.xlu0 %379
    %383 = vst.msk [vmem:[#allocation10 + $0x3] sm:$0x1] %vm166, %v378
    %384 = vst.msk [vmem:[#allocation10 + $0xb] sm:$0x1] %vm166, %v380
    %s385 = scalar_lea.vmem [#allocation4], 8
    %v386 = vld [vmem:[%s385] sm:$0x3]
    %v387 = vpack.c.bf16 %v372, %v372
    %389 = vrot.lane.b32.xlu0 %v387, 32
    %v390 = vpop.permute.xlu0 %389
    %v392 = vsel %vm97, %v390, 0
    %394 = vmatpush.bf16.msra.mxu0 0
    %395 = vmatpush.bf16.msra.mxu0 0
    %396 = vmatpush.bf16.msra.mxu0 0
    %397 = vmatpush.bf16.msra.mxu0 0
    %398 = vmatpush.bf16.msra.mxu0 0
    %399 = vmatpush.bf16.msra.mxu0 0
    %400 = vmatpush.bf16.msra.mxu0 %v94
    %401 = vmatpush.bf16.msra.mxu0 %v93
    %402 = vmatmul.bf16.gmra.mxu0 %v392
    %v403 = vpop.f32.mrf.mxu0
    %v404 = vadd.f32 0.0, %v403
    %v405 = vpop.f32.mrf.mxu0
    %406 = vdwg.mxu0
    %v407 = vadd.f32 %v386, %v404
    %v408 = vxor.u32 %v407, 2147483648
    %v409 = vmul.f32 %v408, 1.442695
    %v410 = vpow.pop %v409
    %v411 = vadd.f32 %v410, 1.0
    %v412 = vrcp.pop %v411
    %v413 = vmul.f32 %v411, %v412
    %v414 = vsub.f32 1.0, %v413
    %v415 = vmul.f32 %v412, %v414
    %v416 = vadd.f32 %v412, %v415
    %vm417 = vweird.f32 %v411
    %vm418 = vweird.f32 %v412
    %vm419 = vmor %vm417, %vm418
    %v420 = vsel %vm419, %v412, %v416
    %v421 = vand.u32 2147483647, %v411
    %vm422 = vcmp.eq.f32.partialorder %v421, 8.507059e+37
    %v423 = vand.u32 %v411, 2147483648
    %v424 = vor.u32 1.1754944e-38, %v423
    %v425 = vsel %vm422, %v424, %v420
    %v426 = vmul.f32 1.0, %v425
    %v427 = vtanh.pop %v407
    %v428 = vmul.f32 %v426, %v366
    %430 = vrot.lane.b32.xlu0 %v427, 64
    %v431 = vpop.permute.xlu0 %430
    %v433 = vmul.f32 %v426, %v431
    %435 = vrot.lane.b32.xlu0 %v433, 32
    %v436 = vpop.permute.xlu0 %435
    %v438 = vadd.f32 %v428, %v436
    %v439 = vtanh.pop %v438
    %441 = vrot.lane.b32.xlu0 %v439, 64
    %v442 = vpop.permute.xlu0 %441
    %v444 = vmul.f32 %v426, %v442
    %v446 = vrot.slane %v444, 1
    %v447 = vperm.slane %v444, 0
    %v448 = vperm.slane %v446, 0
    %449 = vrot.lane.b32.xlu0 %v447, 32
    %v450 = vpop.permute.xlu0 %449
    %451 = vrot.lane.b32.xlu0 %v448, 32
    %v452 = vpop.permute.xlu0 %451
    %455 = vst.msk [vmem:[#allocation10 + $0x4] sm:$0x1] %vm166, %v450
    %456 = vst.msk [vmem:[#allocation10 + $0xc] sm:$0x1] %vm166, %v452
    %s457 = scalar_lea.vmem [#allocation4], 10
    %v458 = vld [vmem:[%s457] sm:$0x3]
    %v459 = vpack.c.bf16 %v444, %v444
    %461 = vrot.lane.b32.xlu0 %v459, 32
    %v462 = vpop.permute.xlu0 %461
    %v464 = vsel %vm97, %v462, 0
    %466 = vmatpush.bf16.msra.mxu0 0
    %467 = vmatpush.bf16.msra.mxu0 0
    %468 = vmatpush.bf16.msra.mxu0 0
    %469 = vmatpush.bf16.msra.mxu0 0
    %470 = vmatpush.bf16.msra.mxu0 0
    %471 = vmatpush.bf16.msra.mxu0 0
    %472 = vmatpush.bf16.msra.mxu0 %v94
    %473 = vmatpush.bf16.msra.mxu0 %v93
    %474 = vmatmul.bf16.gmra.mxu0 %v464
    %v475 = vpop.f32.mrf.mxu0
    %v476 = vadd.f32 0.0, %v475
    %v477 = vpop.f32.mrf.mxu0
    %478 = vdwg.mxu0
    %v479 = vadd.f32 %v458, %v476
    %v480 = vxor.u32 %v479, 2147483648
    %v481 = vmul.f32 %v480, 1.442695
    %v482 = vpow.pop %v481
    %v483 = vadd.f32 %v482, 1.0
    %v484 = vrcp.pop %v483
    %v485 = vmul.f32 %v483, %v484
    %v486 = vsub.f32 1.0, %v485
    %v487 = vmul.f32 %v484, %v486
    %v488 = vadd.f32 %v484, %v487
    %vm489 = vweird.f32 %v483
    %vm490 = vweird.f32 %v484
    %vm491 = vmor %vm489, %vm490
    %v492 = vsel %vm491, %v484, %v488
    %v493 = vand.u32 2147483647, %v483
    %vm494 = vcmp.eq.f32.partialorder %v493, 8.507059e+37
    %v495 = vand.u32 %v483, 2147483648
    %v496 = vor.u32 1.1754944e-38, %v495
    %v497 = vsel %vm494, %v496, %v492
    %v498 = vmul.f32 1.0, %v497
    %v499 = vtanh.pop %v479
    %v500 = vmul.f32 %v498, %v438
    %502 = vrot.lane.b32.xlu0 %v499, 64
    %v503 = vpop.permute.xlu0 %502
    %v505 = vmul.f32 %v498, %v503
    %507 = vrot.lane.b32.xlu0 %v505, 32
    %v508 = vpop.permute.xlu0 %507
    %v510 = vadd.f32 %v500, %v508
    %v511 = vtanh.pop %v510
    %513 = vrot.lane.b32.xlu0 %v511, 64
    %v514 = vpop.permute.xlu0 %513
    %v516 = vmul.f32 %v498, %v514
    %v518 = vrot.slane %v516, 1
    %v519 = vperm.slane %v516, 0
    %v520 = vperm.slane %v518, 0
    %521 = vrot.lane.b32.xlu0 %v519, 32
    %v522 = vpop.permute.xlu0 %521
    %523 = vrot.lane.b32.xlu0 %v520, 32
    %v524 = vpop.permute.xlu0 %523
    %527 = vst.msk [vmem:[#allocation10 + $0x5] sm:$0x1] %vm166, %v522
    %528 = vst.msk [vmem:[#allocation10 + $0xd] sm:$0x1] %vm166, %v524
    %s529 = scalar_lea.vmem [#allocation4], 12
    %v530 = vld [vmem:[%s529] sm:$0x3]
    %v531 = vpack.c.bf16 %v516, %v516
    %533 = vrot.lane.b32.xlu0 %v531, 32
    %v534 = vpop.permute.xlu0 %533
    %v536 = vsel %vm97, %v534, 0
    %538 = vmatpush.bf16.msra.mxu0 0
    %539 = vmatpush.bf16.msra.mxu0 0
    %540 = vmatpush.bf16.msra.mxu0 0
    %541 = vmatpush.bf16.msra.mxu0 0
    %542 = vmatpush.bf16.msra.mxu0 0
    %543 = vmatpush.bf16.msra.mxu0 0
    %544 = vmatpush.bf16.msra.mxu0 %v94
    %545 = vmatpush.bf16.msra.mxu0 %v93
    %546 = vmatmul.bf16.gmra.mxu0 %v536
    %v547 = vpop.f32.mrf.mxu0
    %v548 = vadd.f32 0.0, %v547
    %v549 = vpop.f32.mrf.mxu0
    %550 = vdwg.mxu0
    %v551 = vadd.f32 %v530, %v548
    %v552 = vxor.u32 %v551, 2147483648
    %v553 = vmul.f32 %v552, 1.442695
    %v554 = vpow.pop %v553
    %v555 = vadd.f32 %v554, 1.0
    %v556 = vrcp.pop %v555
    %v557 = vmul.f32 %v555, %v556
    %v558 = vsub.f32 1.0, %v557
    %v559 = vmul.f32 %v556, %v558
    %v560 = vadd.f32 %v556, %v559
    %vm561 = vweird.f32 %v555
    %vm562 = vweird.f32 %v556
    %vm563 = vmor %vm561, %vm562
    %v564 = vsel %vm563, %v556, %v560
    %v565 = vand.u32 2147483647, %v555
    %vm566 = vcmp.eq.f32.partialorder %v565, 8.507059e+37
    %v567 = vand.u32 %v555, 2147483648
    %v568 = vor.u32 1.1754944e-38, %v567
    %v569 = vsel %vm566, %v568, %v564
    %v570 = vmul.f32 1.0, %v569
    %v571 = vtanh.pop %v551
    %v572 = vmul.f32 %v570, %v510
    %574 = vrot.lane.b32.xlu0 %v571, 64
    %v575 = vpop.permute.xlu0 %574
    %v577 = vmul.f32 %v570, %v575
    %579 = vrot.lane.b32.xlu0 %v577, 32
    %v580 = vpop.permute.xlu0 %579
    %v582 = vadd.f32 %v572, %v580
    %v583 = vtanh.pop %v582
    %585 = vrot.lane.b32.xlu0 %v583, 64
    %v586 = vpop.permute.xlu0 %585
    %v588 = vmul.f32 %v570, %v586
    %v590 = vrot.slane %v588, 1
    %v591 = vperm.slane %v588, 0
    %v592 = vperm.slane %v590, 0
    %593 = vrot.lane.b32.xlu0 %v591, 32
    %v594 = vpop.permute.xlu0 %593
    %595 = vrot.lane.b32.xlu0 %v592, 32
    %v596 = vpop.permute.xlu0 %595
    %599 = vst.msk [vmem:[#allocation10 + $0x6] sm:$0x1] %vm166, %v594
    %600 = vst.msk [vmem:[#allocation10 + $0xe] sm:$0x1] %vm166, %v596
    %s601 = scalar_lea.vmem [#allocation4], 14
    %v602 = vld [vmem:[%s601] sm:$0x3]
    %v603 = vpack.c.bf16 %v588, %v588
    %605 = vrot.lane.b32.xlu0 %v603, 32
    %v606 = vpop.permute.xlu0 %605
    %v608 = vsel %vm97, %v606, 0
    %610 = vmatpush.bf16.msra.mxu0 0
    %611 = vmatpush.bf16.msra.mxu0 0
    %612 = vmatpush.bf16.msra.mxu0 0
    %613 = vmatpush.bf16.msra.mxu0 0
    %614 = vmatpush.bf16.msra.mxu0 0
    %615 = vmatpush.bf16.msra.mxu0 0
    %616 = vmatpush.bf16.msra.mxu0 %v94
    %617 = vmatpush.bf16.msra.mxu0 %v93
    %618 = vmatmul.bf16.gmra.mxu0 %v608
    %v619 = vpop.f32.mrf.mxu0
    %v620 = vadd.f32 0.0, %v619
    %v621 = vpop.f32.mrf.mxu0
    %622 = vdwg.mxu0
    %v623 = vadd.f32 %v602, %v620
    %v624 = vxor.u32 %v623, 2147483648
    %v625 = vmul.f32 %v624, 1.442695
    %v626 = vpow.pop %v625
    %v627 = vadd.f32 %v626, 1.0
    %v628 = vrcp.pop %v627
    %v629 = vmul.f32 %v627, %v628
    %v630 = vsub.f32 1.0, %v629
    %v631 = vmul.f32 %v628, %v630
    %v632 = vadd.f32 %v628, %v631
    %vm633 = vweird.f32 %v627
    %vm634 = vweird.f32 %v628
    %vm635 = vmor %vm633, %vm634
    %v636 = vsel %vm635, %v628, %v632
    %v637 = vand.u32 2147483647, %v627
    %vm638 = vcmp.eq.f32.partialorder %v637, 8.507059e+37
    %v639 = vand.u32 %v627, 2147483648
    %v640 = vor.u32 1.1754944e-38, %v639
    %v641 = vsel %vm638, %v640, %v636
    %v642 = vmul.f32 1.0, %v641
    %v643 = vtanh.pop %v623
    %v644 = vmul.f32 %v642, %v582
    %646 = vrot.lane.b32.xlu0 %v643, 64
    %v647 = vpop.permute.xlu0 %646
    %v649 = vmul.f32 %v642, %v647
    %651 = vrot.lane.b32.xlu0 %v649, 32
    %v652 = vpop.permute.xlu0 %651
    %v654 = vadd.f32 %v644, %v652
    %v655 = vtanh.pop %v654
    %657 = vrot.lane.b32.xlu0 %v655, 64
    %v658 = vpop.permute.xlu0 %657
    %v660 = vmul.f32 %v642, %v658
    %v662 = vrot.slane %v660, 1
    %v663 = vperm.slane %v660, 0
    %v664 = vperm.slane %v662, 0
    %665 = vrot.lane.b32.xlu0 %v663, 32
    %v666 = vpop.permute.xlu0 %665
    %667 = vrot.lane.b32.xlu0 %v664, 32
    %v668 = vpop.permute.xlu0 %667
    %671 = vst.msk [vmem:[#allocation10 + $0x7] sm:$0x1] %vm166, %v666
    %672 = vst.msk [vmem:[#allocation10 + $0xf] sm:$0x1] %vm166, %v668
    %673 = vrot.lane.b32.xlu0 %v660, 32
    %v674 = vpop.permute.xlu0 %673
    %vm676 = vcmask 254976
    %677 = vst.msk [vmem:[#allocation2] sm:$0x3] %vm676, %v674
    %679 = vrot.lane.b32.xlu0 %v654, 96
    %v680 = vpop.permute.xlu0 %679
    %682 = vst.msk [vmem:[#allocation3] sm:$0x3] %vm676, %v680
    // Predicated region
    $region34: #{tpu_custom_call.1} parent=1 // pred_check
      %p683 = pneg %p68
    $region35: #{tpu_custom_call.1} parent=1 // pred_check_branch
      %685 = sbr.rel (%p683) target = $region37
    $region36: #{tpu_custom_call.1} parent=1 // pred_region
      %686 = vst.msk [vmem:[#allocation11] sm:$0x3] %vm676, %v674
      %687 = vst.msk [vmem:[#allocation13] sm:$0x3] %vm676, %v680
    $region37: #{tpu_custom_call.1} parent=1 // pred_fallthru
      _
    // Predicated region
    $region38: #{tpu_custom_call.1} parent=1 // pred_check
      _
    $region39: #{tpu_custom_call.1} parent=1 // pred_check_branch
      %689 = sbr.rel (0) target = $region41
    $region40: #{tpu_custom_call.1} parent=1 // pred_region
      %691 = vsyncadd [#allocation6], 0
      %s692 = sshll.u32 [#allocation10], 4
      %s693 = int_to_ptr.vmem [resolvable:$true] %s692
      %s694 = sshll.u32 %s4, 4
      %s695 = int_to_ptr.hbm [resolvable:$true] %s694
      %700 = dma.vmem_to_hbm [thread:$0]  %s693, 256, %s695, [#allocation6], 128, 128, 8
    $region41: #{tpu_custom_call.1} parent=1 // pred_fallthru
      _
    // Predicated region
    $region42: #{tpu_custom_call.1} parent=1 // pred_check
      _
    $region43: #{tpu_custom_call.1} parent=1 // pred_check_branch
      %702 = sbr.rel (0) target = $region45
    $region44: #{tpu_custom_call.1} parent=1 // pred_region
      %704 = vsyncadd [#allocation12], 0
      %s706 = sshll.u32 [#allocation11], 4
      %s707 = int_to_ptr.vmem [resolvable:$true] %s706
      %s708 = sshll.u32 %s5, 4
      %s709 = int_to_ptr.hbm [resolvable:$true] %s708
      %711 = dma.vmem_to_hbm [thread:$0]  %s707, 32, %s709, [#allocation12]
    $region45: #{tpu_custom_call.1} parent=1 // pred_fallthru
      _
    // Predicated region
    $region46: #{tpu_custom_call.1} parent=1 // pred_check
      _
    $region47: #{tpu_custom_call.1} parent=1 // pred_check_branch
      %713 = sbr.rel (0) target = $region49
    $region48: #{tpu_custom_call.1} parent=1 // pred_region
      %715 = vsyncadd [#allocation12], 0
      %s717 = sshll.u32 [#allocation13], 4
      %s718 = int_to_ptr.vmem [resolvable:$true] %s717
      %s719 = sshll.u32 %s6, 4
      %s720 = int_to_ptr.hbm [resolvable:$true] %s719
      %722 = dma.vmem_to_hbm [thread:$0]  %s718, 32, %s720, [#allocation12]
    $region49: #{tpu_custom_call.1} parent=1 // pred_fallthru
      _
    // Predicated region
    $region50: #{tpu_custom_call.1} parent=1 // pred_check
      _
    $region51: #{tpu_custom_call.1} parent=1 // pred_check_branch
      %724 = sbr.rel (0) target = $region53
    $region52: #{tpu_custom_call.1} parent=1 // pred_region
      %726 = dma.done [#allocation6], 256
    $region53: #{tpu_custom_call.1} parent=1 // pred_fallthru
      _
    // Predicated region
    $region54: #{tpu_custom_call.1} parent=1 // pred_check
      _
    $region55: #{tpu_custom_call.1} parent=1 // pred_check_branch
      %728 = sbr.rel (0) target = $region57
    $region56: #{tpu_custom_call.1} parent=1 // pred_region
      %730 = dma.done [#allocation12], 32
    $region57: #{tpu_custom_call.1} parent=1 // pred_fallthru
      _
    // Predicated region
    $region58: #{tpu_custom_call.1} parent=1 // pred_check
      _
    $region59: #{tpu_custom_call.1} parent=1 // pred_check_branch
      %732 = sbr.rel (0) target = $region61
    $region60: #{tpu_custom_call.1} parent=1 // pred_region
      %734 = dma.done [#allocation12], 32
    $region61: #{tpu_custom_call.1} parent=1 // pred_fallthru
      _
    %735 = vsyncpa [#allocation5], 1
    %736 = vsyncpa [#allocation8], 1
    %737 = vsyncpa [#allocation6], 1
    %738 = vsyncpa [#allocation12], 1

</llo_original>
